<compile_context>
chip_gen: v6e
topology: v6e:2x2x1
jax: 0.10.0
libtpu: 0.0.40
codegen_flags: <defaults>
</compile_context>

<pallas_src>
import functools

import jax
import jax.numpy as jnp
from jax.experimental import pallas as pl
from jax.experimental.pallas import tpu as pltpu


# ----------------------------- Pallas kernel -----------------------------

def _linear_relu_kernel(x_ref, w_ref, b_ref, o_ref, acc_ref):
    """One (tm, tn) output tile; K is reduced over grid axis 2."""
    k = pl.program_id(2)

    @pl.when(k == 0)
    def _():
        acc_ref[...] = jnp.zeros_like(acc_ref)

    # bf16 x bf16 -> f32 accumulation on the MXU.
    acc_ref[...] += jnp.dot(x_ref[...], w_ref[...],
                            preferred_element_type=jnp.float32)

    @pl.when(k == pl.num_programs(2) - 1)
    def _():
        y = acc_ref[...] + b_ref[...]          # (tm,tn) + (1,tn) broadcast
        o_ref[...] = jnp.maximum(y, 0.0).astype(o_ref.dtype)


# ----------------------------- Wrapper -----------------------------

def _round_up(v, m):
    return (v + m - 1) // m * m


@functools.partial(jax.jit, static_argnames=("tm", "tn", "tk"))
def mlp_forward(x, w, b, *, tm=128, tn=128, tk=256):
    """relu(x @ w + b)   x:(M,K) f32, w:(K,N) f32 (pre-transposed), b:(N,) f32."""
    M, K = x.shape
    Kw, N = w.shape
    assert K == Kw and b.shape == (N,)

    Mp, Kp, Np = _round_up(M, tm), _round_up(K, tk), _round_up(N, tn)

    # bf16 operands (f32 accumulate inside the kernel); zero-pad to tile grid.
    x_p = jnp.zeros((Mp, Kp), jnp.bfloat16).at[:M, :K].set(x.astype(jnp.bfloat16))
    w_p = jnp.zeros((Kp, Np), jnp.bfloat16).at[:K, :N].set(w.astype(jnp.bfloat16))
    b_p = jnp.zeros((1, Np), jnp.float32).at[0, :N].set(b)

    grid = (Mp // tm, Np // tn, Kp // tk)

    out = pl.pallas_call(
        _linear_relu_kernel,
        out_shape=jax.ShapeDtypeStruct((Mp, Np), jnp.float32),
        grid_spec=pltpu.PrefetchScalarGridSpec(
            num_scalar_prefetch=0,
            grid=grid,
            in_specs=[
                pl.BlockSpec((tm, tk), lambda i, j, k: (i, k)),   # x tile
                pl.BlockSpec((tk, tn), lambda i, j, k: (k, j)),   # w tile
                pl.BlockSpec((1, tn), lambda i, j, k: (0, j)),    # bias row
            ],
            out_specs=pl.BlockSpec((tm, tn), lambda i, j, k: (i, j)),
            scratch_shapes=[pltpu.VMEM((tm, tn), jnp.float32)],
        ),
        compiler_params=pltpu.CompilerParams(
            dimension_semantics=("parallel", "parallel", "arbitrary"),
        ),
    )(x_p, w_p, b_p)

    return out[:M, :N]


# ----------------------------- Setup / main -----------------------------

def init_mlp_params(key, in_ft, out_ft):
    """PyTorch nn.Linear-style init; weight stored as (in_ft, out_ft) = W.T."""
    k_w, k_b = jax.random.split(key)
    bound = 1.0 / jnp.sqrt(float(in_ft))
    w = jax.random.uniform(k_w, (in_ft, out_ft), jnp.float32, -bound, bound)
    b = jax.random.uniform(k_b, (out_ft,), jnp.float32, -bound, bound)
    return w, b


if __name__ == "__main__":
    batch, in_ft, out_ft = 128, 512, 256

    key = jax.random.PRNGKey(0)
    k_x, k_p = jax.random.split(key)

    x = jax.random.normal(k_x, (batch, in_ft), jnp.float32)
    w, b = init_mlp_params(k_p, in_ft, out_ft)

    out = mlp_forward(x, w, b)
    out = jax.block_until_ready(out)

    # Reference with the same bf16-operand / f32-accumulate numerics.
    ref = jnp.maximum(
        jnp.dot(x.astype(jnp.bfloat16), w.astype(jnp.bfloat16),
                preferred_element_type=jnp.float32) + b[None, :],
        0.0,
    )

    assert out.shape == (batch, out_ft)
    assert jnp.allclose(out, ref, rtol=1e-2, atol=1e-2), (
        float(jnp.max(jnp.abs(out - ref))))

    print("KERNEL_OK")
</pallas_src>

<mosaic_0001>
module attributes {stable_mosaic.version = 11 : i64} {
  func.func @_linear_relu_kernel(%arg0: i32, %arg1: i32, %arg2: i32, %arg3: memref<128x256xbf16, #tpu.memory_space<vmem>>, %arg4: memref<256x128xbf16, #tpu.memory_space<vmem>>, %arg5: memref<1x128xf32, #tpu.memory_space<vmem>>, %arg6: memref<128x128xf32, #tpu.memory_space<vmem>>, %arg7: memref<128x128xf32, #tpu.memory_space<vmem>>) attributes {dimension_semantics = [#tpu.dimension_semantics<parallel>, #tpu.dimension_semantics<parallel>, #tpu.dimension_semantics<arbitrary>], iteration_bounds = array<i64: 1, 2, 2>, scalar_prefetch = 0 : i64, scratch_operands = 1 : i64, tpu.core_type = #tpu.core_type<tc>, window_params = [{transform_indices = @transform_0, window_bounds = array<i64: 128, 256>}, {transform_indices = @transform_1, window_bounds = array<i64: 256, 128>}, {transform_indices = @transform_2, window_bounds = array<i64: 1, 128>}, {transform_indices = @transform_3, window_bounds = array<i64: 128, 128>}]} {
    %c0_i32 = arith.constant 0 : i32
    %0 = arith.cmpi eq, %arg2, %c0_i32 : i32
    %1 = arith.extui %0 : i1 to i32
    %c0_i32_0 = arith.constant 0 : i32
    %2 = arith.cmpi ne, %1, %c0_i32_0 : i32
    scf.if %2 {
      %cst_9 = arith.constant 0.000000e+00 : f32
      %12 = vector.broadcast %cst_9 : f32 to vector<128x128xf32>
      %c0_10 = arith.constant 0 : index
      %c0_11 = arith.constant 0 : index
      %13 = vector.load %arg7[%c0_10, %c0_11] : memref<128x128xf32, #tpu.memory_space<vmem>>, vector<128x128xf32>
      tpu.vector_store %arg7[%c0_10, %c0_11], %12 {strides = array<i32>} : memref<128x128xf32, #tpu.memory_space<vmem>>, vector<128x128xf32>,
    } else {
    }
    %c0 = arith.constant 0 : index
    %c0_1 = arith.constant 0 : index
    %3 = vector.load %arg7[%c0, %c0_1] : memref<128x128xf32, #tpu.memory_space<vmem>>, vector<128x128xf32>
    %c0_2 = arith.constant 0 : index
    %c0_3 = arith.constant 0 : index
    %4 = vector.load %arg3[%c0_2, %c0_3] : memref<128x256xbf16, #tpu.memory_space<vmem>>, vector<128x256xbf16>
    %c0_4 = arith.constant 0 : index
    %c0_5 = arith.constant 0 : index
    %5 = vector.load %arg4[%c0_4, %c0_5] : memref<256x128xbf16, #tpu.memory_space<vmem>>, vector<256x128xbf16>
    %cst = arith.constant dense<0.000000e+00> : vector<128x128xf32>
    %6 = tpu.matmul %4, %5, %cst {dimension_numbers = #tpu.dot_dimension_numbers<[1], [0], [0], [1], [0, 0, 1, 1], [], []>} : vector<128x256xbf16>, vector<256x128xbf16>, vector<128x128xf32> -> vector<128x128xf32>
    %7 = arith.addf %3, %6 : vector<128x128xf32>
    %c0_6 = arith.constant 0 : index
    %c0_7 = arith.constant 0 : index
    %8 = vector.load %arg7[%c0_6, %c0_7] : memref<128x128xf32, #tpu.memory_space<vmem>>, vector<128x128xf32>
    tpu.vector_store %arg7[%c0_6, %c0_7], %7 {strides = array<i32>} : memref<128x128xf32, #tpu.memory_space<vmem>>, vector<128x128xf32>,
    %c1_i32 = arith.constant 1 : i32
    %9 = arith.cmpi eq, %arg2, %c1_i32 : i32
    %10 = arith.extui %9 : i1 to i32
    %c0_i32_8 = arith.constant 0 : i32
    %11 = arith.cmpi ne, %10, %c0_i32_8 : i32
    scf.if %11 {
      %c0_9 = arith.constant 0 : index
      %c0_10 = arith.constant 0 : index
      %12 = vector.load %arg7[%c0_9, %c0_10] : memref<128x128xf32, #tpu.memory_space<vmem>>, vector<128x128xf32>
      %c0_11 = arith.constant 0 : index
      %c0_12 = arith.constant 0 : index
      %13 = vector.load %arg5[%c0_11, %c0_12] : memref<1x128xf32, #tpu.memory_space<vmem>>, vector<1x128xf32>
      %14 = vector.broadcast %13 : vector<1x128xf32> to vector<128x128xf32>
      %15 = arith.addf %12, %14 : vector<128x128xf32>
      %cst_13 = arith.constant 0.000000e+00 : f32
      %16 = vector.broadcast %cst_13 : f32 to vector<128x128xf32>
      %17 = arith.maximumf %15, %16 : vector<128x128xf32>
      %c0_14 = arith.constant 0 : index
      %c0_15 = arith.constant 0 : index
      %18 = vector.load %arg6[%c0_14, %c0_15] : memref<128x128xf32, #tpu.memory_space<vmem>>, vector<128x128xf32>
      tpu.vector_store %arg6[%c0_14, %c0_15], %17 {strides = array<i32>} : memref<128x128xf32, #tpu.memory_space<vmem>>, vector<128x128xf32>,
    } else {
    }
    return
  }
  func.func @transform_0(%arg0: i32, %arg1: i32, %arg2: i32) -> (i32, i32) {
    %c0_i32 = arith.constant 0 : i32
    return %arg0, %arg2 : i32, i32
  }
  func.func @transform_1(%arg0: i32, %arg1: i32, %arg2: i32) -> (i32, i32) {
    %c0_i32 = arith.constant 0 : i32
    return %arg2, %arg1 : i32, i32
  }
  func.func @transform_2(%arg0: i32, %arg1: i32, %arg2: i32) -> (i32, i32) {
    %c0_i32 = arith.constant 0 : i32
    %c0_i32_0 = arith.constant 0 : i32
    return %c0_i32, %arg1 : i32, i32
  }
  func.func @transform_3(%arg0: i32, %arg1: i32, %arg2: i32) -> (i32, i32) {
    %c0_i32 = arith.constant 0 : i32
    return %arg0, %arg1 : i32, i32
  }
}

</mosaic_0001>

<llo_original>
// kernel: mlp_forward.1
$region0: #{mlp_forward.1}
  #allocation0 [shape = 'u32[]', space=smem, size = 0x4, offset = 0x4, fixed_abs, tag = 'smem constant byte address 0x4 - core index']
  #allocation1 [shape = 'u32[144,128]{1,0:T(1,128)}', space=vmem, size = 0x12000, scoped, tag = 'internal scratch']
  #allocation2 [shape = 'f32[128,128]{1,0:T(8,128)}', space=vmem, size = 0x10000, scoped, tag = 'scratch operand']
  %s0 = inlined_call_operand.vmem [shape: bf16[128,512], index: 0, kind: input, shape index: {}]
  %s1 = inlined_call_operand.vmem [shape: bf16[512,256], index: 1, kind: input, shape index: {}]
  %s2 = inlined_call_operand.vmem [shape: f32[1,256], index: 2, kind: input, shape index: {}]
  %s3 = inlined_call_operand.hbm [shape: f32[128,256], index: 3, kind: output, shape index: {}]
  %s4 = sld [smem:[#allocation0]]
  $region132: #{mlp_forward.1} parent=0
    _
  %s6 = ssub.s32 1, %s4
  %s7 = scalar_select 0, %s6, %s4
  $region1: #{mlp_forward.1} parent=0
    #allocation3 [shape = 'u8[131072]{0}', space=vmem, size = 0x20000, scoped, tag = 'input window, operand 0']
    #allocation4 [shape = 'u8[131072]{0}', space=vmem, size = 0x20000, scoped, tag = 'input window, operand 1']
    #allocation5 [shape = 'u8[131072]{0}', space=vmem, size = 0x20000, scoped, tag = 'output window, operand 0']
    #allocation6 [shape = 's32[2]{0}', space=sflag, size = 0x8, scoped, tag = 'scoped memory for mlp_forward.1']
    %8 = vsyncpa [#allocation6], 0
    %s9 = scalar_lea.sflag [#allocation6], 1
    %10 = vsyncpa %s9, 0
    loop: start=0, step=1, limit=6
    $region2: #{mlp_forward.1} parent=1 // loop_pre_header
      _
    $region3: #{mlp_forward.1} parent=1 // loop_header
      %s12 = sphi 0, %s16
      %p13 = scmp.ge.s32.totalorder %s12, 6
      %s19 = sphi 0, %s38
      %s20 = sphi 0, %s34
      %s21 = sphi 0, %s30
      %s22 = sphi 0, %s19
      %s23 = sphi 0, %s20
      %s24 = sphi 0, %s21
      %s25 = sphi 0, %s22
      %s26 = sphi 0, %s23
      %s27 = sphi 0, %s24
      %s43 = sphi 0, %s45
      %s46 = sphi 0, %s43
      %s47 = sphi 0, %s46
      %s63 = sphi 0, %s47
      %s71 = sphi 0, %s73
      %s74 = sphi 0, %s71
      %s75 = sphi 0, %s74
      %s91 = sphi 0, %s75
      %s97 = sphi 0, %s99
      %s100 = sphi 0, %s97
      %s101 = sphi 0, %s100
      %s117 = sphi 0, %s101
      %s125 = sphi 0, %s127
      %s128 = sphi 0, %s125
      %s129 = sphi 0, %s128
      %s145 = sphi 0, %s129
    $region4: #{mlp_forward.1} parent=1 // loop_header_branch
      %15 = sbr.rel (%p13) target = $region8
    $region5: #{mlp_forward.1} parent=1 // loop_body
      %s17 = ssub.s32 %s12, 1
      %s18 = ssub.s32 %s12, 2
      %s28 = sadd.s32 1, %s21
      %p29 = scmp.ge.s32.totalorder %s28, 2
      %s30 = scalar_select %p29, 0, %s28
      %s31 = sadd.s32 1, %s20
      %s32 = scalar_select %p29, %s31, %s20
      %p33 = scmp.ge.s32.totalorder %s32, 2
      %s34 = scalar_select %p33, 0, %s32
      %s35 = sadd.s32 1, %s19
      %s36 = scalar_select %p33, %s35, %s19
      %p37 = scmp.ge.s32.totalorder %s36, 1
      %s38 = scalar_select %p37, 0, %s36
      %s39 = ssub.s32 %s19, %s38
      %s40 = ssub.s32 %s21, %s30
      %s41 = sor.u32 %s39, %s40
      %p42 = scmp.eq.s32.totalorder %s41, 0
      %s44 = sadd.s32 %s43, 1
      %s45 = scalar_select %p42, %s43, %s44
      %p48 = pneg %p42
      %p49 = scmp.eq.s32.totalorder %s12, 3
      %p50 = por %p48, %p49
      %p51 = scmp.ne.s32.totalorder %s43, %s46
      %p52 = scmp.eq.s32.totalorder %s12, 0
      %p53 = por %p51, %p52
      %p54 = scmp.ne.s32.totalorder %s43, %s46
      %p55 = scmp.eq.s32.totalorder %s17, 3
      %p56 = por %p54, %p55
      %p57 = scmp.ne.s32.totalorder %s46, %s47
      %p58 = scmp.eq.s32.totalorder %s17, 0
      %p59 = por %p57, %p58
      %p60 = scmp.ne.s32.totalorder %s46, %s47
      %p61 = scmp.eq.s32.totalorder %s18, 3
      %p62 = por %p60, %p61
      %p64 = scmp.ne.s32.totalorder %s47, %s63
      %p65 = scmp.eq.s32.totalorder %s18, 0
      %p66 = por %p64, %p65
      %s67 = ssub.s32 %s21, %s30
      %s68 = ssub.s32 %s20, %s34
      %s69 = sor.u32 %s67, %s68
      %p70 = scmp.eq.s32.totalorder %s69, 0
      %s72 = sadd.s32 %s71, 1
      %s73 = scalar_select %p70, %s71, %s72
      %p76 = pneg %p70
      %p77 = scmp.eq.s32.totalorder %s12, 3
      %p78 = por %p76, %p77
      %p79 = scmp.ne.s32.totalorder %s71, %s74
      %p80 = scmp.eq.s32.totalorder %s12, 0
      %p81 = por %p79, %p80
      %p82 = scmp.ne.s32.totalorder %s71, %s74
      %p83 = scmp.eq.s32.totalorder %s17, 3
      %p84 = por %p82, %p83
      %p85 = scmp.ne.s32.totalorder %s74, %s75
      %p86 = scmp.eq.s32.totalorder %s17, 0
      %p87 = por %p85, %p86
      %p88 = scmp.ne.s32.totalorder %s74, %s75
      %p89 = scmp.eq.s32.totalorder %s18, 3
      %p90 = por %p88, %p89
      %p92 = scmp.ne.s32.totalorder %s75, %s91
      %p93 = scmp.eq.s32.totalorder %s18, 0
      %p94 = por %p92, %p93
      %s95 = ssub.s32 %s20, %s34
      %p96 = scmp.eq.s32.totalorder %s95, 0
      %s98 = sadd.s32 %s97, 1
      %s99 = scalar_select %p96, %s97, %s98
      %p102 = pneg %p96
      %p103 = scmp.eq.s32.totalorder %s12, 3
      %p104 = por %p102, %p103
      %p105 = scmp.ne.s32.totalorder %s97, %s100
      %p106 = scmp.eq.s32.totalorder %s12, 0
      %p107 = por %p105, %p106
      %p108 = scmp.ne.s32.totalorder %s97, %s100
      %p109 = scmp.eq.s32.totalorder %s17, 3
      %p110 = por %p108, %p109
      %p111 = scmp.ne.s32.totalorder %s100, %s101
      %p112 = scmp.eq.s32.totalorder %s17, 0
      %p113 = por %p111, %p112
      %p114 = scmp.ne.s32.totalorder %s100, %s101
      %p115 = scmp.eq.s32.totalorder %s18, 3
      %p116 = por %p114, %p115
      %p118 = scmp.ne.s32.totalorder %s101, %s117
      %p119 = scmp.eq.s32.totalorder %s18, 0
      %p120 = por %p118, %p119
      %s121 = ssub.s32 %s19, %s38
      %s122 = ssub.s32 %s20, %s34
      %s123 = sor.u32 %s121, %s122
      %p124 = scmp.eq.s32.totalorder %s123, 0
      %s126 = sadd.s32 %s125, 1
      %s127 = scalar_select %p124, %s125, %s126
      %p130 = pneg %p124
      %p131 = scmp.eq.s32.totalorder %s12, 3
      %p132 = por %p130, %p131
      %p133 = scmp.ne.s32.totalorder %s125, %s128
      %p134 = scmp.eq.s32.totalorder %s12, 0
      %p135 = por %p133, %p134
      %p136 = scmp.ne.s32.totalorder %s125, %s128
      %p137 = scmp.eq.s32.totalorder %s17, 3
      %p138 = por %p136, %p137
      %p139 = scmp.ne.s32.totalorder %s128, %s129
      %p140 = scmp.eq.s32.totalorder %s17, 0
      %p141 = por %p139, %p140
      %p142 = scmp.ne.s32.totalorder %s128, %s129
      %p143 = scmp.eq.s32.totalorder %s18, 3
      %p144 = por %p142, %p143
      %p146 = scmp.ne.s32.totalorder %s129, %s145
      %p147 = scmp.eq.s32.totalorder %s18, 0
      %p148 = por %p146, %p147
      %p149 = scmp.le.s32.totalorder 1, %s12
      %p150 = scmp.lt.s32.totalorder %s12, 5
      %p151 = pnand %p149, %p150
      %p152 = pneg %p151
      // Predicated region
      $region9: #{mlp_forward.1} parent=5 // pred_check
        _
      $region10: #{mlp_forward.1} parent=5 // pred_check_branch
        %154 = sbr.rel (%p151) target = $region12
      $region11: #{mlp_forward.1} parent=5 // pred_region
        %s155 = ssub.s32 %s12, 1
      $region12: #{mlp_forward.1} parent=5 // pred_fallthru
        _
      %p156 = scmp.lt.s32.totalorder %s12, 4
      // Predicated region
      $region13: #{mlp_forward.1} parent=5 // pred_check
        %p157 = pneg %p156
      $region14: #{mlp_forward.1} parent=5 // pred_check_branch
        %159 = sbr.rel (%p157) target = $region16
      $region15: #{mlp_forward.1} parent=5 // pred_region
        // Predicated region
        $region17: #{mlp_forward.1} parent=15 // pred_check
          %p160 = pneg %p53
        $region18: #{mlp_forward.1} parent=15 // pred_check_branch
          %162 = sbr.rel (%p160) target = $region20
        $region19: #{mlp_forward.1} parent=15 // pred_region
          %s163 = sand.u32 %s43, 1
          %s164 = sand.u32 %s43, 1
          %s165 = smul.addr %s164, 128
          %s166 = scalar_lea.vmem [#allocation3], %s165
          %s167 = smul.u32 16, %s19
          %s168 = smul.u32 2, %s21
          %s169 = smul.addr %s167, 4
          %s170 = sadd.s32 %s168, %s169
          %s171 = smul.addr %s170, 4
          %s172 = scalar_lea.vmem %s0, %s171
          // Predicated region
          $region21: #{mlp_forward.1} parent=19 // pred_check
            _
          $region22: #{mlp_forward.1} parent=19 // pred_check_branch
            %174 = sbr.rel (0) target = $region24
          $region23: #{mlp_forward.1} parent=19 // pred_region
            // Predicated region
            $region25: #{mlp_forward.1} parent=23 // pred_check
              _
            $region26: #{mlp_forward.1} parent=23 // pred_check_branch
              %176 = sbr.rel (0) target = $region28
            $region27: #{mlp_forward.1} parent=23 // pred_region
              // Predicated region
              $region40: #{mlp_forward.1} parent=27 // pred_check
                _
              $region41: #{mlp_forward.1} parent=27 // pred_check_branch
                %222 = sbr.rel (0) target = $region43
              $region42: #{mlp_forward.1} parent=27 // pred_region
                loop: start=0, step=1, limit=1
                $region44: #{mlp_forward.1} parent=42 // loop_pre_header
                  _
                $region45: #{mlp_forward.1} parent=42 // loop_header
                  %s224 = sphi 0, %s228
                  %p225 = scmp.ge.s32.totalorder %s224, 1
                  %s229 = sphi %s172, %s172
                  %s230 = sphi %s166, %s166
                $region46: #{mlp_forward.1} parent=42 // loop_header_branch
                  %227 = sbr.rel (%p225) target = $region50
                $region47: #{mlp_forward.1} parent=42 // loop_body
                  %v231 = vld [vmem:[%s229] sm:$0xff]
                  %232 = vst [vmem:[%s230] sm:$0xff] %v231
                  %v233 = vld [vmem:[%s229 + $0x10] sm:$0xff]
                  %234 = vst [vmem:[%s230 + $0x8] sm:$0xff] %v233
                  %v235 = vld [vmem:[%s229 + $0x20] sm:$0xff]
                  %236 = vst [vmem:[%s230 + $0x10] sm:$0xff] %v235
                  %v237 = vld [vmem:[%s229 + $0x30] sm:$0xff]
                  %238 = vst [vmem:[%s230 + $0x18] sm:$0xff] %v237
                  %v239 = vld [vmem:[%s229 + $0x40] sm:$0xff]
                  %240 = vst [vmem:[%s230 + $0x20] sm:$0xff] %v239
                  %v241 = vld [vmem:[%s229 + $0x50] sm:$0xff]
                  %242 = vst [vmem:[%s230 + $0x28] sm:$0xff] %v241
                  %v243 = vld [vmem:[%s229 + $0x60] sm:$0xff]
                  %244 = vst [vmem:[%s230 + $0x30] sm:$0xff] %v243
                  %v245 = vld [vmem:[%s229 + $0x70] sm:$0xff]
                  %246 = vst [vmem:[%s230 + $0x38] sm:$0xff] %v245
                  %v247 = vld [vmem:[%s229 + $0x80] sm:$0xff]
                  %248 = vst [vmem:[%s230 + $0x40] sm:$0xff] %v247
                  %v249 = vld [vmem:[%s229 + $0x90] sm:$0xff]
                  %250 = vst [vmem:[%s230 + $0x48] sm:$0xff] %v249
                  %v251 = vld [vmem:[%s229 + $0xa0] sm:$0xff]
                  %252 = vst [vmem:[%s230 + $0x50] sm:$0xff] %v251
                  %v253 = vld [vmem:[%s229 + $0xb0] sm:$0xff]
                  %254 = vst [vmem:[%s230 + $0x58] sm:$0xff] %v253
                  %v255 = vld [vmem:[%s229 + $0xc0] sm:$0xff]
                  %256 = vst [vmem:[%s230 + $0x60] sm:$0xff] %v255
                  %v257 = vld [vmem:[%s229 + $0xd0] sm:$0xff]
                  %258 = vst [vmem:[%s230 + $0x68] sm:$0xff] %v257
                  %v259 = vld [vmem:[%s229 + $0xe0] sm:$0xff]
                  %260 = vst [vmem:[%s230 + $0x70] sm:$0xff] %v259
                  %v261 = vld [vmem:[%s229 + $0xf0] sm:$0xff]
                  %262 = vst [vmem:[%s230 + $0x78] sm:$0xff] %v261
                $region48: #{mlp_forward.1} parent=42 // loop_footer
                  %s228 = sadd.s32 1, %s224
                $region49: #{mlp_forward.1} parent=42 // loop_footer_branch
                  %223 = sbr.rel target = $region45
                $region50: #{mlp_forward.1} parent=42 // loop_exit
                  _
              $region43: #{mlp_forward.1} parent=27 // pred_fallthru
                _
              // Predicated region
              $region51: #{mlp_forward.1} parent=27 // pred_check
                _
              $region52: #{mlp_forward.1} parent=27 // pred_check_branch
                %264 = sbr.rel target = $region54
              $region53: #{mlp_forward.1} parent=27 // pred_region
                _
              $region54: #{mlp_forward.1} parent=27 // pred_fallthru
                _
            $region28: #{mlp_forward.1} parent=23 // pred_fallthru
              _
            // Predicated region
            $region29: #{mlp_forward.1} parent=23 // pred_check
              _
            $region30: #{mlp_forward.1} parent=23 // pred_check_branch
              %178 = sbr.rel target = $region32
            $region31: #{mlp_forward.1} parent=23 // pred_region
              %s180 = ssub.s32 256, 1
              loop: start=0, step=1, limit=1
              $region33: #{mlp_forward.1} parent=31 // loop_pre_header
                _
              $region34: #{mlp_forward.1} parent=31 // loop_header
                %s182 = sphi 0, %s186
                %p183 = scmp.ge.s32.totalorder %s182, 1
                %s187 = sphi %s172, %s172
                %s188 = sphi %s166, %s166
              $region35: #{mlp_forward.1} parent=31 // loop_header_branch
                %185 = sbr.rel (%p183) target = $region39
              $region36: #{mlp_forward.1} parent=31 // loop_body
                %v189 = vld [vmem:[%s187] sm:%s180]
                %190 = vst [vmem:[%s188] sm:%s180] %v189
                %v191 = vld [vmem:[%s187 + $0x10] sm:%s180]
                %192 = vst [vmem:[%s188 + $0x8] sm:%s180] %v191
                %v193 = vld [vmem:[%s187 + $0x20] sm:%s180]
                %194 = vst [vmem:[%s188 + $0x10] sm:%s180] %v193
                %v195 = vld [vmem:[%s187 + $0x30] sm:%s180]
                %196 = vst [vmem:[%s188 + $0x18] sm:%s180] %v195
                %v197 = vld [vmem:[%s187 + $0x40] sm:%s180]
                %198 = vst [vmem:[%s188 + $0x20] sm:%s180] %v197
                %v199 = vld [vmem:[%s187 + $0x50] sm:%s180]
                %200 = vst [vmem:[%s188 + $0x28] sm:%s180] %v199
                %v201 = vld [vmem:[%s187 + $0x60] sm:%s180]
                %202 = vst [vmem:[%s188 + $0x30] sm:%s180] %v201
                %v203 = vld [vmem:[%s187 + $0x70] sm:%s180]
                %204 = vst [vmem:[%s188 + $0x38] sm:%s180] %v203
                %v205 = vld [vmem:[%s187 + $0x80] sm:%s180]
                %206 = vst [vmem:[%s188 + $0x40] sm:%s180] %v205
                %v207 = vld [vmem:[%s187 + $0x90] sm:%s180]
                %208 = vst [vmem:[%s188 + $0x48] sm:%s180] %v207
                %v209 = vld [vmem:[%s187 + $0xa0] sm:%s180]
                %210 = vst [vmem:[%s188 + $0x50] sm:%s180] %v209
                %v211 = vld [vmem:[%s187 + $0xb0] sm:%s180]
                %212 = vst [vmem:[%s188 + $0x58] sm:%s180] %v211
                %v213 = vld [vmem:[%s187 + $0xc0] sm:%s180]
                %214 = vst [vmem:[%s188 + $0x60] sm:%s180] %v213
                %v215 = vld [vmem:[%s187 + $0xd0] sm:%s180]
                %216 = vst [vmem:[%s188 + $0x68] sm:%s180] %v215
                %v217 = vld [vmem:[%s187 + $0xe0] sm:%s180]
                %218 = vst [vmem:[%s188 + $0x70] sm:%s180] %v217
                %v219 = vld [vmem:[%s187 + $0xf0] sm:%s180]
                %220 = vst [vmem:[%s188 + $0x78] sm:%s180] %v219
              $region37: #{mlp_forward.1} parent=31 // loop_footer
                %s186 = sadd.s32 1, %s182
              $region38: #{mlp_forward.1} parent=31 // loop_footer_branch
                %181 = sbr.rel target = $region34
              $region39: #{mlp_forward.1} parent=31 // loop_exit
                _
            $region32: #{mlp_forward.1} parent=23 // pred_fallthru
              _
          $region24: #{mlp_forward.1} parent=19 // pred_fallthru
            _
          %265 = vnop
        $region20: #{mlp_forward.1} parent=15 // pred_fallthru
          _
        // Predicated region
        $region55: #{mlp_forward.1} parent=15 // pred_check
          %p266 = pneg %p81
        $region56: #{mlp_forward.1} parent=15 // pred_check_branch
          %268 = sbr.rel (%p266) target = $region58
        $region57: #{mlp_forward.1} parent=15 // pred_region
          %s269 = sand.u32 %s71, 1
          %s270 = sand.u32 %s71, 1
          %s271 = smul.addr %s270, 128
          %s272 = scalar_lea.vmem [#allocation4], %s271
          %s273 = smul.u32 32, %s21
          %s274 = smul.addr %s273, 2
          %s275 = sadd.s32 %s20, %s274
          %s276 = smul.addr %s275, 4
          %s277 = scalar_lea.vmem %s1, %s276
          // Predicated region
          $region59: #{mlp_forward.1} parent=57 // pred_check
            _
          $region60: #{mlp_forward.1} parent=57 // pred_check_branch
            %279 = sbr.rel (0) target = $region62
          $region61: #{mlp_forward.1} parent=57 // pred_region
            // Predicated region
            $region63: #{mlp_forward.1} parent=61 // pred_check
              _
            $region64: #{mlp_forward.1} parent=61 // pred_check_branch
              %281 = sbr.rel target = $region66
            $region65: #{mlp_forward.1} parent=61 // pred_region
              // Predicated region
              $region78: #{mlp_forward.1} parent=65 // pred_check
                _
              $region79: #{mlp_forward.1} parent=65 // pred_check_branch
                %359 = sbr.rel (0) target = $region81
              $region80: #{mlp_forward.1} parent=65 // pred_region
                loop: start=0, step=1, limit=1
                $region82: #{mlp_forward.1} parent=80 // loop_pre_header
                  _
                $region83: #{mlp_forward.1} parent=80 // loop_header
                  %s361 = sphi 0, %s365
                  %p362 = scmp.ge.s32.totalorder %s361, 1
                  %s366 = sphi %s277, %s277
                  %s367 = sphi %s272, %s272
                $region84: #{mlp_forward.1} parent=80 // loop_header_branch
                  %364 = sbr.rel (%p362) target = $region88
                $region85: #{mlp_forward.1} parent=80 // loop_body
                  _
                $region86: #{mlp_forward.1} parent=80 // loop_footer
                  %s365 = sadd.s32 1, %s361
                $region87: #{mlp_forward.1} parent=80 // loop_footer_branch
                  %360 = sbr.rel target = $region83
                $region88: #{mlp_forward.1} parent=80 // loop_exit
                  _
                %s369 = ssub.s32 16, 1
                loop: start=0, step=1, limit=1
                $region89: #{mlp_forward.1} parent=80 // loop_pre_header
                  _
                $region90: #{mlp_forward.1} parent=80 // loop_header
                  %s371 = sphi 0, %s375
                  %p372 = scmp.ge.s32.totalorder %s371, 1
                  %s376 = sphi %s277, %s277
                  %s377 = sphi %s272, %s272
                $region91: #{mlp_forward.1} parent=80 // loop_header_branch
                  %374 = sbr.rel (%p372) target = $region95
                $region92: #{mlp_forward.1} parent=80 // loop_body
                  %v378 = vld [vmem:[%s376] sm:%s369]
                  %379 = vst [vmem:[%s377] sm:%s369] %v378
                  %v380 = vld [vmem:[%s376 + $0x8] sm:%s369]
                  %381 = vst [vmem:[%s377 + $0x4] sm:%s369] %v380
                  %v382 = vld [vmem:[%s376 + $0x10] sm:%s369]
                  %383 = vst [vmem:[%s377 + $0x8] sm:%s369] %v382
                  %v384 = vld [vmem:[%s376 + $0x18] sm:%s369]
                  %385 = vst [vmem:[%s377 + $0xc] sm:%s369] %v384
                  %v386 = vld [vmem:[%s376 + $0x20] sm:%s369]
                  %387 = vst [vmem:[%s377 + $0x10] sm:%s369] %v386
                  %v388 = vld [vmem:[%s376 + $0x28] sm:%s369]
                  %389 = vst [vmem:[%s377 + $0x14] sm:%s369] %v388
                  %v390 = vld [vmem:[%s376 + $0x30] sm:%s369]
                  %391 = vst [vmem:[%s377 + $0x18] sm:%s369] %v390
                  %v392 = vld [vmem:[%s376 + $0x38] sm:%s369]
                  %393 = vst [vmem:[%s377 + $0x1c] sm:%s369] %v392
                  %v394 = vld [vmem:[%s376 + $0x40] sm:%s369]
                  %395 = vst [vmem:[%s377 + $0x20] sm:%s369] %v394
                  %v396 = vld [vmem:[%s376 + $0x48] sm:%s369]
                  %397 = vst [vmem:[%s377 + $0x24] sm:%s369] %v396
                  %v398 = vld [vmem:[%s376 + $0x50] sm:%s369]
                  %399 = vst [vmem:[%s377 + $0x28] sm:%s369] %v398
                  %v400 = vld [vmem:[%s376 + $0x58] sm:%s369]
                  %401 = vst [vmem:[%s377 + $0x2c] sm:%s369] %v400
                  %v402 = vld [vmem:[%s376 + $0x60] sm:%s369]
                  %403 = vst [vmem:[%s377 + $0x30] sm:%s369] %v402
                  %v404 = vld [vmem:[%s376 + $0x68] sm:%s369]
                  %405 = vst [vmem:[%s377 + $0x34] sm:%s369] %v404
                  %v406 = vld [vmem:[%s376 + $0x70] sm:%s369]
                  %407 = vst [vmem:[%s377 + $0x38] sm:%s369] %v406
                  %v408 = vld [vmem:[%s376 + $0x78] sm:%s369]
                  %409 = vst [vmem:[%s377 + $0x3c] sm:%s369] %v408
                  %v410 = vld [vmem:[%s376 + $0x80] sm:%s369]
                  %411 = vst [vmem:[%s377 + $0x40] sm:%s369] %v410
                  %v412 = vld [vmem:[%s376 + $0x88] sm:%s369]
                  %413 = vst [vmem:[%s377 + $0x44] sm:%s369] %v412
                  %v414 = vld [vmem:[%s376 + $0x90] sm:%s369]
                  %415 = vst [vmem:[%s377 + $0x48] sm:%s369] %v414
                  %v416 = vld [vmem:[%s376 + $0x98] sm:%s369]
                  %417 = vst [vmem:[%s377 + $0x4c] sm:%s369] %v416
                  %v418 = vld [vmem:[%s376 + $0xa0] sm:%s369]
                  %419 = vst [vmem:[%s377 + $0x50] sm:%s369] %v418
                  %v420 = vld [vmem:[%s376 + $0xa8] sm:%s369]
                  %421 = vst [vmem:[%s377 + $0x54] sm:%s369] %v420
                  %v422 = vld [vmem:[%s376 + $0xb0] sm:%s369]
                  %423 = vst [vmem:[%s377 + $0x58] sm:%s369] %v422
                  %v424 = vld [vmem:[%s376 + $0xb8] sm:%s369]
                  %425 = vst [vmem:[%s377 + $0x5c] sm:%s369] %v424
                  %v426 = vld [vmem:[%s376 + $0xc0] sm:%s369]
                  %427 = vst [vmem:[%s377 + $0x60] sm:%s369] %v426
                  %v428 = vld [vmem:[%s376 + $0xc8] sm:%s369]
                  %429 = vst [vmem:[%s377 + $0x64] sm:%s369] %v428
                  %v430 = vld [vmem:[%s376 + $0xd0] sm:%s369]
                  %431 = vst [vmem:[%s377 + $0x68] sm:%s369] %v430
                  %v432 = vld [vmem:[%s376 + $0xd8] sm:%s369]
                  %433 = vst [vmem:[%s377 + $0x6c] sm:%s369] %v432
                  %v434 = vld [vmem:[%s376 + $0xe0] sm:%s369]
                  %435 = vst [vmem:[%s377 + $0x70] sm:%s369] %v434
                  %v436 = vld [vmem:[%s376 + $0xe8] sm:%s369]
                  %437 = vst [vmem:[%s377 + $0x74] sm:%s369] %v436
                  %v438 = vld [vmem:[%s376 + $0xf0] sm:%s369]
                  %439 = vst [vmem:[%s377 + $0x78] sm:%s369] %v438
                  %v440 = vld [vmem:[%s376 + $0xf8] sm:%s369]
                  %441 = vst [vmem:[%s377 + $0x7c] sm:%s369] %v440
                $region93: #{mlp_forward.1} parent=80 // loop_footer
                  %s375 = sadd.s32 1, %s371
                $region94: #{mlp_forward.1} parent=80 // loop_footer_branch
                  %370 = sbr.rel target = $region90
                $region95: #{mlp_forward.1} parent=80 // loop_exit
                  _
              $region81: #{mlp_forward.1} parent=65 // pred_fallthru
                _
            $region66: #{mlp_forward.1} parent=61 // pred_fallthru
              _
            // Predicated region
            $region67: #{mlp_forward.1} parent=61 // pred_check
              _
            $region68: #{mlp_forward.1} parent=61 // pred_check_branch
              %283 = sbr.rel (0) target = $region70
            $region69: #{mlp_forward.1} parent=61 // pred_region
              %s285 = ssub.s32 16, 1
              loop: start=0, step=1, limit=1
              $region71: #{mlp_forward.1} parent=69 // loop_pre_header
                _
              $region72: #{mlp_forward.1} parent=69 // loop_header
                %s287 = sphi 0, %s291
                %p288 = scmp.ge.s32.totalorder %s287, 1
                %s292 = sphi %s277, %s277
                %s293 = sphi %s272, %s272
              $region73: #{mlp_forward.1} parent=69 // loop_header_branch
                %290 = sbr.rel (%p288) target = $region77
              $region74: #{mlp_forward.1} parent=69 // loop_body
                %v294 = vld [vmem:[%s292] sm:%s285]
                %295 = vst [vmem:[%s293] sm:%s285] %v294
                %v296 = vld [vmem:[%s292 + $0x8] sm:%s285]
                %297 = vst [vmem:[%s293 + $0x4] sm:%s285] %v296
                %v298 = vld [vmem:[%s292 + $0x10] sm:%s285]
                %299 = vst [vmem:[%s293 + $0x8] sm:%s285] %v298
                %v300 = vld [vmem:[%s292 + $0x18] sm:%s285]
                %301 = vst [vmem:[%s293 + $0xc] sm:%s285] %v300
                %v302 = vld [vmem:[%s292 + $0x20] sm:%s285]
                %303 = vst [vmem:[%s293 + $0x10] sm:%s285] %v302
                %v304 = vld [vmem:[%s292 + $0x28] sm:%s285]
                %305 = vst [vmem:[%s293 + $0x14] sm:%s285] %v304
                %v306 = vld [vmem:[%s292 + $0x30] sm:%s285]
                %307 = vst [vmem:[%s293 + $0x18] sm:%s285] %v306
                %v308 = vld [vmem:[%s292 + $0x38] sm:%s285]
                %309 = vst [vmem:[%s293 + $0x1c] sm:%s285] %v308
                %v310 = vld [vmem:[%s292 + $0x40] sm:%s285]
                %311 = vst [vmem:[%s293 + $0x20] sm:%s285] %v310
                %v312 = vld [vmem:[%s292 + $0x48] sm:%s285]
                %313 = vst [vmem:[%s293 + $0x24] sm:%s285] %v312
                %v314 = vld [vmem:[%s292 + $0x50] sm:%s285]
                %315 = vst [vmem:[%s293 + $0x28] sm:%s285] %v314
                %v316 = vld [vmem:[%s292 + $0x58] sm:%s285]
                %317 = vst [vmem:[%s293 + $0x2c] sm:%s285] %v316
                %v318 = vld [vmem:[%s292 + $0x60] sm:%s285]
                %319 = vst [vmem:[%s293 + $0x30] sm:%s285] %v318
                %v320 = vld [vmem:[%s292 + $0x68] sm:%s285]
                %321 = vst [vmem:[%s293 + $0x34] sm:%s285] %v320
                %v322 = vld [vmem:[%s292 + $0x70] sm:%s285]
                %323 = vst [vmem:[%s293 + $0x38] sm:%s285] %v322
                %v324 = vld [vmem:[%s292 + $0x78] sm:%s285]
                %325 = vst [vmem:[%s293 + $0x3c] sm:%s285] %v324
                %v326 = vld [vmem:[%s292 + $0x80] sm:%s285]
                %327 = vst [vmem:[%s293 + $0x40] sm:%s285] %v326
                %v328 = vld [vmem:[%s292 + $0x88] sm:%s285]
                %329 = vst [vmem:[%s293 + $0x44] sm:%s285] %v328
                %v330 = vld [vmem:[%s292 + $0x90] sm:%s285]
                %331 = vst [vmem:[%s293 + $0x48] sm:%s285] %v330
                %v332 = vld [vmem:[%s292 + $0x98] sm:%s285]
                %333 = vst [vmem:[%s293 + $0x4c] sm:%s285] %v332
                %v334 = vld [vmem:[%s292 + $0xa0] sm:%s285]
                %335 = vst [vmem:[%s293 + $0x50] sm:%s285] %v334
                %v336 = vld [vmem:[%s292 + $0xa8] sm:%s285]
                %337 = vst [vmem:[%s293 + $0x54] sm:%s285] %v336
                %v338 = vld [vmem:[%s292 + $0xb0] sm:%s285]
                %339 = vst [vmem:[%s293 + $0x58] sm:%s285] %v338
                %v340 = vld [vmem:[%s292 + $0xb8] sm:%s285]
                %341 = vst [vmem:[%s293 + $0x5c] sm:%s285] %v340
                %v342 = vld [vmem:[%s292 + $0xc0] sm:%s285]
                %343 = vst [vmem:[%s293 + $0x60] sm:%s285] %v342
                %v344 = vld [vmem:[%s292 + $0xc8] sm:%s285]
                %345 = vst [vmem:[%s293 + $0x64] sm:%s285] %v344
                %v346 = vld [vmem:[%s292 + $0xd0] sm:%s285]
                %347 = vst [vmem:[%s293 + $0x68] sm:%s285] %v346
                %v348 = vld [vmem:[%s292 + $0xd8] sm:%s285]
                %349 = vst [vmem:[%s293 + $0x6c] sm:%s285] %v348
                %v350 = vld [vmem:[%s292 + $0xe0] sm:%s285]
                %351 = vst [vmem:[%s293 + $0x70] sm:%s285] %v350
                %v352 = vld [vmem:[%s292 + $0xe8] sm:%s285]
                %353 = vst [vmem:[%s293 + $0x74] sm:%s285] %v352
                %v354 = vld [vmem:[%s292 + $0xf0] sm:%s285]
                %355 = vst [vmem:[%s293 + $0x78] sm:%s285] %v354
                %v356 = vld [vmem:[%s292 + $0xf8] sm:%s285]
                %357 = vst [vmem:[%s293 + $0x7c] sm:%s285] %v356
              $region75: #{mlp_forward.1} parent=69 // loop_footer
                %s291 = sadd.s32 1, %s287
              $region76: #{mlp_forward.1} parent=69 // loop_footer_branch
                %286 = sbr.rel target = $region72
              $region77: #{mlp_forward.1} parent=69 // loop_exit
                _
            $region70: #{mlp_forward.1} parent=61 // pred_fallthru
              _
          $region62: #{mlp_forward.1} parent=57 // pred_fallthru
            _
          %442 = vnop
        $region58: #{mlp_forward.1} parent=15 // pred_fallthru
          _
        // Predicated region
        $region96: #{mlp_forward.1} parent=15 // pred_check
          %p443 = pneg %p107
        $region97: #{mlp_forward.1} parent=15 // pred_check_branch
          %445 = sbr.rel (%p443) target = $region99
        $region98: #{mlp_forward.1} parent=15 // pred_region
          %p446 = scmp.lt.s32.totalorder %s20, 1
          %s447 = scalar_select %p446, %s20, 1
          %s448 = scalar_lea.vmem %s2, %s447
        $region99: #{mlp_forward.1} parent=15 // pred_fallthru
          _
      $region16: #{mlp_forward.1} parent=5 // pred_fallthru
        _
      %p449 = scmp.le.s32.totalorder 1, %s12
      %p450 = scmp.lt.s32.totalorder %s12, 5
      %p451 = pnand %p449, %p450
      %p452 = pneg %p451
      // Predicated region
      $region100: #{mlp_forward.1} parent=5 // pred_check
        _
      $region101: #{mlp_forward.1} parent=5 // pred_check_branch
        %454 = sbr.rel (%p451) target = $region103
      $region102: #{mlp_forward.1} parent=5 // pred_region
        %s455 = ssub.s32 %s12, 1
        %s456 = sand.u32 %s46, 1
        %s457 = sand.u32 %s46, 1
        %s458 = smul.addr %s457, 128
        %s459 = scalar_lea.vmem [#allocation3], %s458
        // Predicated region
        $region104: #{mlp_forward.1} parent=102 // pred_check
          %p460 = pneg %p59
        $region105: #{mlp_forward.1} parent=102 // pred_check_branch
          %462 = sbr.rel (%p460) target = $region107
        $region106: #{mlp_forward.1} parent=102 // pred_region
          _
        $region107: #{mlp_forward.1} parent=102 // pred_fallthru
          _
        %s463 = sand.u32 %s74, 1
        %s464 = sand.u32 %s74, 1
        %s465 = smul.addr %s464, 128
        %s466 = scalar_lea.vmem [#allocation4], %s465
        // Predicated region
        $region108: #{mlp_forward.1} parent=102 // pred_check
          %p467 = pneg %p87
        $region109: #{mlp_forward.1} parent=102 // pred_check_branch
          %469 = sbr.rel (%p467) target = $region111
        $region110: #{mlp_forward.1} parent=102 // pred_region
          _
        $region111: #{mlp_forward.1} parent=102 // pred_fallthru
          _
        %s470 = sand.u32 %s46, 1
        %s471 = sand.u32 %s46, 1
        %s472 = smul.addr %s471, 128
        %s473 = scalar_lea.vmem [#allocation3], %s472
        %p474 = pneg %p59
        %p475 = pneg %p56
        %s476 = sand.u32 %s74, 1
        %s477 = sand.u32 %s74, 1
        %s478 = smul.addr %s477, 128
        %s479 = scalar_lea.vmem [#allocation4], %s478
        %p480 = pneg %p87
        %p481 = pneg %p84
        %p482 = scmp.lt.s32.totalorder %s23, 1
        %s483 = scalar_select %p482, %s23, 1
        %s484 = scalar_lea.vmem %s2, %s483
        %p485 = pneg %p113
        %p486 = pneg %p110
        %p487 = pneg %p141
        %p488 = pneg %p138
        %s489 = sand.u32 %s128, 1
        %s490 = scalar_lea.sflag [#allocation6], %s489
        %s491 = sand.u32 %s128, 1
        %s492 = smul.addr %s491, 128
        %s493 = scalar_lea.vmem [#allocation5], %s492
        %s494 = smul.u32 16, %s22
        %s495 = smul.u32 2, %s24
        %s496 = smul.u32 32, %s24
        %p497 = scmp.lt.s32.totalorder %s23, 1
        %s498 = scalar_select %p497, %s23, 1
        %s499 = scalar_lea.vmem %s2, %s498
        %s500 = smul.u32 16, %s22
        %p502 = scmp.eq.s32.totalorder %s24, 0
        // Predicated region
        $region112: #{mlp_forward.1} parent=102 // pred_check
          %p503 = pneg %p502
        $region113: #{mlp_forward.1} parent=102 // pred_check_branch
          %505 = sbr.rel (%p503) target = $region115
        $region114: #{mlp_forward.1} parent=102 // pred_region
          %506 = vst [vmem:[#allocation2] sm:$0xff] 0.0
          %507 = vst [vmem:[#allocation2 + $0x8] sm:$0xff] 0.0
          %508 = vst [vmem:[#allocation2 + $0x10] sm:$0xff] 0.0
          %509 = vst [vmem:[#allocation2 + $0x18] sm:$0xff] 0.0
          %510 = vst [vmem:[#allocation2 + $0x20] sm:$0xff] 0.0
          %511 = vst [vmem:[#allocation2 + $0x28] sm:$0xff] 0.0
          %512 = vst [vmem:[#allocation2 + $0x30] sm:$0xff] 0.0
          %513 = vst [vmem:[#allocation2 + $0x38] sm:$0xff] 0.0
          %514 = vst [vmem:[#allocation2 + $0x40] sm:$0xff] 0.0
          %515 = vst [vmem:[#allocation2 + $0x48] sm:$0xff] 0.0
          %516 = vst [vmem:[#allocation2 + $0x50] sm:$0xff] 0.0
          %517 = vst [vmem:[#allocation2 + $0x58] sm:$0xff] 0.0
          %518 = vst [vmem:[#allocation2 + $0x60] sm:$0xff] 0.0
          %519 = vst [vmem:[#allocation2 + $0x68] sm:$0xff] 0.0
          %520 = vst [vmem:[#allocation2 + $0x70] sm:$0xff] 0.0
          %521 = vst [vmem:[#allocation2 + $0x78] sm:$0xff] 0.0
        $region115: #{mlp_forward.1} parent=102 // pred_fallthru
          _
        %v522 = vld [vmem:[#allocation2] sm:$0xff]
        %v523 = vld [vmem:[#allocation2 + $0x8] sm:$0xff]
        %v524 = vld [vmem:[#allocation2 + $0x10] sm:$0xff]
        %v525 = vld [vmem:[#allocation2 + $0x18] sm:$0xff]
        %v526 = vld [vmem:[#allocation2 + $0x20] sm:$0xff]
        %v527 = vld [vmem:[#allocation2 + $0x28] sm:$0xff]
        %v528 = vld [vmem:[#allocation2 + $0x30] sm:$0xff]
        %v529 = vld [vmem:[#allocation2 + $0x38] sm:$0xff]
        %v530 = vld [vmem:[#allocation2 + $0x40] sm:$0xff]
        %v531 = vld [vmem:[#allocation2 + $0x48] sm:$0xff]
        %v532 = vld [vmem:[#allocation2 + $0x50] sm:$0xff]
        %v533 = vld [vmem:[#allocation2 + $0x58] sm:$0xff]
        %v534 = vld [vmem:[#allocation2 + $0x60] sm:$0xff]
        %v535 = vld [vmem:[#allocation2 + $0x68] sm:$0xff]
        %v536 = vld [vmem:[#allocation2 + $0x70] sm:$0xff]
        %v537 = vld [vmem:[#allocation2 + $0x78] sm:$0xff]
        %v538 = vld [vmem:[%s459] sm:$0xff]
        %v539 = vld [vmem:[%s459 + $0x8] sm:$0xff]
        %v540 = vld [vmem:[%s459 + $0x10] sm:$0xff]
        %v541 = vld [vmem:[%s459 + $0x18] sm:$0xff]
        %v542 = vld [vmem:[%s459 + $0x20] sm:$0xff]
        %v543 = vld [vmem:[%s459 + $0x28] sm:$0xff]
        %v544 = vld [vmem:[%s459 + $0x30] sm:$0xff]
        %v545 = vld [vmem:[%s459 + $0x38] sm:$0xff]
        %v546 = vld [vmem:[%s459 + $0x40] sm:$0xff]
        %v547 = vld [vmem:[%s459 + $0x48] sm:$0xff]
        %v548 = vld [vmem:[%s459 + $0x50] sm:$0xff]
        %v549 = vld [vmem:[%s459 + $0x58] sm:$0xff]
        %v550 = vld [vmem:[%s459 + $0x60] sm:$0xff]
        %v551 = vld [vmem:[%s459 + $0x68] sm:$0xff]
        %v552 = vld [vmem:[%s459 + $0x70] sm:$0xff]
        %v553 = vld [vmem:[%s459 + $0x78] sm:$0xff]
        %v554 = vld [vmem:[%s466] sm:$0xf]
        %v555 = vld [vmem:[%s466 + $0x4] sm:$0xf]
        %v556 = vld [vmem:[%s466 + $0x8] sm:$0xf]
        %v557 = vld [vmem:[%s466 + $0xc] sm:$0xf]
        %v558 = vld [vmem:[%s466 + $0x10] sm:$0xf]
        %v559 = vld [vmem:[%s466 + $0x14] sm:$0xf]
        %v560 = vld [vmem:[%s466 + $0x18] sm:$0xf]
        %v561 = vld [vmem:[%s466 + $0x1c] sm:$0xf]
        %v562 = vld [vmem:[%s466 + $0x20] sm:$0xf]
        %v563 = vld [vmem:[%s466 + $0x24] sm:$0xf]
        %v564 = vld [vmem:[%s466 + $0x28] sm:$0xf]
        %v565 = vld [vmem:[%s466 + $0x2c] sm:$0xf]
        %v566 = vld [vmem:[%s466 + $0x30] sm:$0xf]
        %v567 = vld [vmem:[%s466 + $0x34] sm:$0xf]
        %v568 = vld [vmem:[%s466 + $0x38] sm:$0xf]
        %v569 = vld [vmem:[%s466 + $0x3c] sm:$0xf]
        %v570 = vld [vmem:[%s466 + $0x40] sm:$0xf]
        %v571 = vld [vmem:[%s466 + $0x44] sm:$0xf]
        %v572 = vld [vmem:[%s466 + $0x48] sm:$0xf]
        %v573 = vld [vmem:[%s466 + $0x4c] sm:$0xf]
        %v574 = vld [vmem:[%s466 + $0x50] sm:$0xf]
        %v575 = vld [vmem:[%s466 + $0x54] sm:$0xf]
        %v576 = vld [vmem:[%s466 + $0x58] sm:$0xf]
        %v577 = vld [vmem:[%s466 + $0x5c] sm:$0xf]
        %v578 = vld [vmem:[%s466 + $0x60] sm:$0xf]
        %v579 = vld [vmem:[%s466 + $0x64] sm:$0xf]
        %v580 = vld [vmem:[%s466 + $0x68] sm:$0xf]
        %v581 = vld [vmem:[%s466 + $0x6c] sm:$0xf]
        %v582 = vld [vmem:[%s466 + $0x70] sm:$0xf]
        %v583 = vld [vmem:[%s466 + $0x74] sm:$0xf]
        %v584 = vld [vmem:[%s466 + $0x78] sm:$0xf]
        %v585 = vld [vmem:[%s466 + $0x7c] sm:$0xf]
        %v602 = vunpack.c.l.b16 %v538
        %v603 = vunpack.c.h.b16 %v538
        %v604 = vunpack.c.l.b16 %v539
        %v605 = vunpack.c.h.b16 %v539
        %v606 = vunpack.c.l.b16 %v540
        %v607 = vunpack.c.h.b16 %v540
        %v608 = vunpack.c.l.b16 %v541
        %v609 = vunpack.c.h.b16 %v541
        %v610 = vunpack.c.l.b16 %v542
        %v611 = vunpack.c.h.b16 %v542
        %v612 = vunpack.c.l.b16 %v543
        %v613 = vunpack.c.h.b16 %v543
        %v614 = vunpack.c.l.b16 %v544
        %v615 = vunpack.c.h.b16 %v544
        %v616 = vunpack.c.l.b16 %v545
        %v617 = vunpack.c.h.b16 %v545
        %v618 = vunpack.c.l.b16 %v546
        %v619 = vunpack.c.h.b16 %v546
        %v620 = vunpack.c.l.b16 %v547
        %v621 = vunpack.c.h.b16 %v547
        %v622 = vunpack.c.l.b16 %v548
        %v623 = vunpack.c.h.b16 %v548
        %v624 = vunpack.c.l.b16 %v549
        %v625 = vunpack.c.h.b16 %v549
        %v626 = vunpack.c.l.b16 %v550
        %v627 = vunpack.c.h.b16 %v550
        %v628 = vunpack.c.l.b16 %v551
        %v629 = vunpack.c.h.b16 %v551
        %v630 = vunpack.c.l.b16 %v552
        %v631 = vunpack.c.h.b16 %v552
        %v632 = vunpack.c.l.b16 %v553
        %v633 = vunpack.c.h.b16 %v553
        %v634 = vpack.c.b16 %v604, %v602
        %v635 = vpack.c.b16 %v605, %v603
        %v636 = vpack.c.b16 %v608, %v606
        %v637 = vpack.c.b16 %v609, %v607
        %v638 = vpack.c.b16 %v612, %v610
        %v639 = vpack.c.b16 %v613, %v611
        %v640 = vpack.c.b16 %v616, %v614
        %v641 = vpack.c.b16 %v617, %v615
        %v642 = vpack.c.b16 %v620, %v618
        %v643 = vpack.c.b16 %v621, %v619
        %v644 = vpack.c.b16 %v624, %v622
        %v645 = vpack.c.b16 %v625, %v623
        %v646 = vpack.c.b16 %v628, %v626
        %v647 = vpack.c.b16 %v629, %v627
        %v648 = vpack.c.b16 %v632, %v630
        %v649 = vpack.c.b16 %v633, %v631
        %v698 = vunpack.c.l.b16 %v554
        %v699 = vunpack.c.l.b16 %v555
        %v700 = vunpack.c.l.b16 %v556
        %v701 = vunpack.c.l.b16 %v557
        %v702 = vunpack.c.l.b16 %v558
        %v703 = vunpack.c.l.b16 %v559
        %v704 = vunpack.c.l.b16 %v560
        %v705 = vunpack.c.l.b16 %v561
        %v706 = vunpack.c.l.b16 %v562
        %v707 = vunpack.c.l.b16 %v563
        %v708 = vunpack.c.l.b16 %v564
        %v709 = vunpack.c.l.b16 %v565
        %v710 = vunpack.c.l.b16 %v566
        %v711 = vunpack.c.l.b16 %v567
        %v712 = vunpack.c.l.b16 %v568
        %v713 = vunpack.c.l.b16 %v569
        %v714 = vunpack.c.l.b16 %v570
        %v715 = vunpack.c.l.b16 %v571
        %v716 = vunpack.c.l.b16 %v572
        %v717 = vunpack.c.l.b16 %v573
        %v718 = vunpack.c.l.b16 %v574
        %v719 = vunpack.c.l.b16 %v575
        %v720 = vunpack.c.l.b16 %v576
        %v721 = vunpack.c.l.b16 %v577
        %v722 = vunpack.c.l.b16 %v578
        %v723 = vunpack.c.l.b16 %v579
        %v724 = vunpack.c.l.b16 %v580
        %v725 = vunpack.c.l.b16 %v581
        %v726 = vunpack.c.l.b16 %v582
        %v727 = vunpack.c.l.b16 %v583
        %v728 = vunpack.c.l.b16 %v584
        %v729 = vunpack.c.l.b16 %v585
        %v730 = vpack.c.b16 %v699, %v698
        %v731 = vpack.c.b16 %v701, %v700
        %v732 = vpack.c.b16 %v703, %v702
        %v733 = vpack.c.b16 %v705, %v704
        %v734 = vpack.c.b16 %v707, %v706
        %v735 = vpack.c.b16 %v709, %v708
        %v736 = vpack.c.b16 %v711, %v710
        %v737 = vpack.c.b16 %v713, %v712
        %v738 = vpack.c.b16 %v715, %v714
        %v739 = vpack.c.b16 %v717, %v716
        %v740 = vpack.c.b16 %v719, %v718
        %v741 = vpack.c.b16 %v721, %v720
        %v742 = vpack.c.b16 %v723, %v722
        %v743 = vpack.c.b16 %v725, %v724
        %v744 = vpack.c.b16 %v727, %v726
        %v745 = vpack.c.b16 %v729, %v728
        %762 = vmatprep.subr.bf16.mxu0 0
        %763 = vmatpush1.bf16.msra.mxu0 %v737
        %764 = vmatprep.subr.bf16.mxu0 0
        %765 = vmatpush1.bf16.msra.mxu0 %v736
        %766 = vmatprep.subr.bf16.mxu0 0
        %767 = vmatpush1.bf16.msra.mxu0 %v735
        %768 = vmatprep.subr.bf16.mxu0 0
        %769 = vmatpush1.bf16.msra.mxu0 %v734
        %770 = vmatprep.subr.bf16.mxu0 0
        %771 = vmatpush1.bf16.msra.mxu0 %v733
        %772 = vmatprep.subr.bf16.mxu0 0
        %773 = vmatpush1.bf16.msra.mxu0 %v732
        %774 = vmatprep.subr.bf16.mxu0 0
        %775 = vmatpush1.bf16.msra.mxu0 %v731
        %776 = vmatprep.subr.bf16.mxu0 0
        %777 = vmatpush1.bf16.msra.mxu0 %v730
        %778 = vmatprep.subr.bf16.mxu0 0
        %779 = vmatpush2.bf16.msra.mxu0 %v745
        %780 = vmatprep.subr.bf16.mxu0 0
        %781 = vmatpush2.bf16.msra.mxu0 %v744
        %782 = vmatprep.subr.bf16.mxu0 0
        %783 = vmatpush2.bf16.msra.mxu0 %v743
        %784 = vmatprep.subr.bf16.mxu0 0
        %785 = vmatpush2.bf16.msra.mxu0 %v742
        %786 = vmatprep.subr.bf16.mxu0 0
        %787 = vmatpush2.bf16.msra.mxu0 %v741
        %788 = vmatprep.subr.bf16.mxu0 0
        %789 = vmatpush2.bf16.msra.mxu0 %v740
        %790 = vmatprep.subr.bf16.mxu0 0
        %791 = vmatpush2.bf16.msra.mxu0 %v739
        %792 = vmatprep.subr.bf16.mxu0 0
        %793 = vmatpush2.bf16.msra.mxu0 %v738
        %794 = vmatprep.mubr.bf16.mxu0 %v635
        %795 = vmatmul.mubr.bf16.gmra.mxu0 %v634
        %v796 = vpop.f32.mrf.mxu0
        %v797 = vadd.f32 0.0, %v796
        %v798 = vpop.f32.mrf.mxu0
        %v799 = vpop.f32.mrf.mxu0
        %v800 = vadd.f32 0.0, %v799
        %v801 = vpop.f32.mrf.mxu0
        %802 = vmatprep.mubr.bf16.mxu0 %v637
        %803 = vmatmul.mubr.bf16.gmra.mxu0 %v636
        %v804 = vpop.f32.mrf.mxu0
        %v805 = vadd.f32 0.0, %v804
        %v806 = vpop.f32.mrf.mxu0
        %v807 = vpop.f32.mrf.mxu0
        %v808 = vadd.f32 0.0, %v807
        %v809 = vpop.f32.mrf.mxu0
        %810 = vmatprep.mubr.bf16.mxu0 %v639
        %811 = vmatmul.mubr.bf16.gmra.mxu0 %v638
        %v812 = vpop.f32.mrf.mxu0
        %v813 = vadd.f32 0.0, %v812
        %v814 = vpop.f32.mrf.mxu0
        %v815 = vpop.f32.mrf.mxu0
        %v816 = vadd.f32 0.0, %v815
        %v817 = vpop.f32.mrf.mxu0
        %818 = vmatprep.mubr.bf16.mxu0 %v641
        %819 = vmatmul.mubr.bf16.gmra.mxu0 %v640
        %v820 = vpop.f32.mrf.mxu0
        %v821 = vadd.f32 0.0, %v820
        %v822 = vpop.f32.mrf.mxu0
        %v823 = vpop.f32.mrf.mxu0
        %v824 = vadd.f32 0.0, %v823
        %v825 = vpop.f32.mrf.mxu0
        %826 = vmatprep.mubr.bf16.mxu0 %v643
        %827 = vmatmul.mubr.bf16.gmra.mxu0 %v642
        %v828 = vpop.f32.mrf.mxu0
        %v829 = vadd.f32 0.0, %v828
        %v830 = vpop.f32.mrf.mxu0
        %v831 = vpop.f32.mrf.mxu0
        %v832 = vadd.f32 0.0, %v831
        %v833 = vpop.f32.mrf.mxu0
        %834 = vmatprep.mubr.bf16.mxu0 %v645
        %835 = vmatmul.mubr.bf16.gmra.mxu0 %v644
        %v836 = vpop.f32.mrf.mxu0
        %v837 = vadd.f32 0.0, %v836
        %v838 = vpop.f32.mrf.mxu0
        %v839 = vpop.f32.mrf.mxu0
        %v840 = vadd.f32 0.0, %v839
        %v841 = vpop.f32.mrf.mxu0
        %842 = vmatprep.mubr.bf16.mxu0 %v647
        %843 = vmatmul.mubr.bf16.gmra.mxu0 %v646
        %v844 = vpop.f32.mrf.mxu0
        %v845 = vadd.f32 0.0, %v844
        %v846 = vpop.f32.mrf.mxu0
        %v847 = vpop.f32.mrf.mxu0
        %v848 = vadd.f32 0.0, %v847
        %v849 = vpop.f32.mrf.mxu0
        %850 = vmatprep.mubr.bf16.mxu0 %v649
        %851 = vmatmul.mubr.bf16.gmra.mxu0 %v648
        %v852 = vpop.f32.mrf.mxu0
        %v853 = vadd.f32 0.0, %v852
        %v854 = vpop.f32.mrf.mxu0
        %v855 = vpop.f32.mrf.mxu0
        %v856 = vadd.f32 0.0, %v855
        %v857 = vpop.f32.mrf.mxu0
        %858 = vdwg.mxu0
        %v859 = vadd.f32 %v522, %v797
        %v860 = vadd.f32 %v523, %v800
        %v861 = vadd.f32 %v524, %v805
        %v862 = vadd.f32 %v525, %v808
        %v863 = vadd.f32 %v526, %v813
        %v864 = vadd.f32 %v527, %v816
        %v865 = vadd.f32 %v528, %v821
        %v866 = vadd.f32 %v529, %v824
        %v867 = vadd.f32 %v530, %v829
        %v868 = vadd.f32 %v531, %v832
        %v869 = vadd.f32 %v532, %v837
        %v870 = vadd.f32 %v533, %v840
        %v871 = vadd.f32 %v534, %v845
        %v872 = vadd.f32 %v535, %v848
        %v873 = vadd.f32 %v536, %v853
        %v874 = vadd.f32 %v537, %v856
        %875 = vst [vmem:[#allocation2] sm:$0xff] %v859
        %876 = vst [vmem:[#allocation2 + $0x8] sm:$0xff] %v860
        %877 = vst [vmem:[#allocation2 + $0x10] sm:$0xff] %v861
        %878 = vst [vmem:[#allocation2 + $0x18] sm:$0xff] %v862
        %879 = vst [vmem:[#allocation2 + $0x20] sm:$0xff] %v863
        %880 = vst [vmem:[#allocation2 + $0x28] sm:$0xff] %v864
        %881 = vst [vmem:[#allocation2 + $0x30] sm:$0xff] %v865
        %882 = vst [vmem:[#allocation2 + $0x38] sm:$0xff] %v866
        %883 = vst [vmem:[#allocation2 + $0x40] sm:$0xff] %v867
        %884 = vst [vmem:[#allocation2 + $0x48] sm:$0xff] %v868
        %885 = vst [vmem:[#allocation2 + $0x50] sm:$0xff] %v869
        %886 = vst [vmem:[#allocation2 + $0x58] sm:$0xff] %v870
        %887 = vst [vmem:[#allocation2 + $0x60] sm:$0xff] %v871
        %888 = vst [vmem:[#allocation2 + $0x68] sm:$0xff] %v872
        %889 = vst [vmem:[#allocation2 + $0x70] sm:$0xff] %v873
        %890 = vst [vmem:[#allocation2 + $0x78] sm:$0xff] %v874
        %p891 = scmp.eq.s32.totalorder %s24, 1
        // Predicated region
        $region116: #{mlp_forward.1} parent=102 // pred_check
          %p892 = pneg %p891
        $region117: #{mlp_forward.1} parent=102 // pred_check_branch
          %894 = sbr.rel (%p892) target = $region119
        $region118: #{mlp_forward.1} parent=102 // pred_region
          %v895 = vld [vmem:[#allocation2] sm:$0xff]
          %v896 = vld [vmem:[#allocation2 + $0x8] sm:$0xff]
          %v897 = vld [vmem:[#allocation2 + $0x10] sm:$0xff]
          %v898 = vld [vmem:[#allocation2 + $0x18] sm:$0xff]
          %v899 = vld [vmem:[#allocation2 + $0x20] sm:$0xff]
          %v900 = vld [vmem:[#allocation2 + $0x28] sm:$0xff]
          %v901 = vld [vmem:[#allocation2 + $0x30] sm:$0xff]
          %v902 = vld [vmem:[#allocation2 + $0x38] sm:$0xff]
          %v903 = vld [vmem:[#allocation2 + $0x40] sm:$0xff]
          %v904 = vld [vmem:[#allocation2 + $0x48] sm:$0xff]
          %v905 = vld [vmem:[#allocation2 + $0x50] sm:$0xff]
          %v906 = vld [vmem:[#allocation2 + $0x58] sm:$0xff]
          %v907 = vld [vmem:[#allocation2 + $0x60] sm:$0xff]
          %v908 = vld [vmem:[#allocation2 + $0x68] sm:$0xff]
          %v909 = vld [vmem:[#allocation2 + $0x70] sm:$0xff]
          %v910 = vld [vmem:[#allocation2 + $0x78] sm:$0xff]
          %v911 = vld [vmem:[%s499] sm:$0x1]
          %v913 = vlaneseq
          %v914 = vshrl.u32 %v913, 7
          %v915 = vsub.s32 0, %v914
          %v916 = vrot.slane %v911, %v915
          %v918 = vadd.f32 %v895, %v916
          %v919 = vadd.f32 %v896, %v916
          %v920 = vadd.f32 %v897, %v916
          %v921 = vadd.f32 %v898, %v916
          %v922 = vadd.f32 %v899, %v916
          %v923 = vadd.f32 %v900, %v916
          %v924 = vadd.f32 %v901, %v916
          %v925 = vadd.f32 %v902, %v916
          %v926 = vadd.f32 %v903, %v916
          %v927 = vadd.f32 %v904, %v916
          %v928 = vadd.f32 %v905, %v916
          %v929 = vadd.f32 %v906, %v916
          %v930 = vadd.f32 %v907, %v916
          %v931 = vadd.f32 %v908, %v916
          %v932 = vadd.f32 %v909, %v916
          %v933 = vadd.f32 %v910, %v916
          %v934 = vmax.f32 %v918, 0.0
          %v935 = vmax.f32 %v919, 0.0
          %v936 = vmax.f32 %v920, 0.0
          %v937 = vmax.f32 %v921, 0.0
          %v938 = vmax.f32 %v922, 0.0
          %v939 = vmax.f32 %v923, 0.0
          %v940 = vmax.f32 %v924, 0.0
          %v941 = vmax.f32 %v925, 0.0
          %v942 = vmax.f32 %v926, 0.0
          %v943 = vmax.f32 %v927, 0.0
          %v944 = vmax.f32 %v928, 0.0
          %v945 = vmax.f32 %v929, 0.0
          %v946 = vmax.f32 %v930, 0.0
          %v947 = vmax.f32 %v931, 0.0
          %v948 = vmax.f32 %v932, 0.0
          %v949 = vmax.f32 %v933, 0.0
          %950 = vst [vmem:[%s493] sm:$0xff] %v934
          %951 = vst [vmem:[%s493 + $0x8] sm:$0xff] %v935
          %952 = vst [vmem:[%s493 + $0x10] sm:$0xff] %v936
          %953 = vst [vmem:[%s493 + $0x18] sm:$0xff] %v937
          %954 = vst [vmem:[%s493 + $0x20] sm:$0xff] %v938
          %955 = vst [vmem:[%s493 + $0x28] sm:$0xff] %v939
          %956 = vst [vmem:[%s493 + $0x30] sm:$0xff] %v940
          %957 = vst [vmem:[%s493 + $0x38] sm:$0xff] %v941
          %958 = vst [vmem:[%s493 + $0x40] sm:$0xff] %v942
          %959 = vst [vmem:[%s493 + $0x48] sm:$0xff] %v943
          %960 = vst [vmem:[%s493 + $0x50] sm:$0xff] %v944
          %961 = vst [vmem:[%s493 + $0x58] sm:$0xff] %v945
          %962 = vst [vmem:[%s493 + $0x60] sm:$0xff] %v946
          %963 = vst [vmem:[%s493 + $0x68] sm:$0xff] %v947
          %964 = vst [vmem:[%s493 + $0x70] sm:$0xff] %v948
          %965 = vst [vmem:[%s493 + $0x78] sm:$0xff] %v949
        $region119: #{mlp_forward.1} parent=102 // pred_fallthru
          _
        %s966 = sand.u32 %s128, 1
        %s967 = scalar_lea.sflag [#allocation6], %s966
        %s968 = sand.u32 %s128, 1
        %s969 = smul.addr %s968, 128
        %s970 = scalar_lea.vmem [#allocation5], %s969
        // Predicated region
        $region120: #{mlp_forward.1} parent=102 // pred_check
          %p971 = pneg %p138
        $region121: #{mlp_forward.1} parent=102 // pred_check_branch
          %973 = sbr.rel (%p971) target = $region123
        $region122: #{mlp_forward.1} parent=102 // pred_region
          %s974 = smul.u32 16, %s22
          %s976 = ssub.s32 2048, 2048
          %977 = vsyncadd %s967, %s976
          %s978 = smul.addr %s974, 2
          %s979 = sadd.s32 %s23, %s978
          %s980 = smul.addr %s979, 128
          %s981 = scalar_lea.hbm %s3, %s980
          %s982 = sshll.u32 %s970, 4
          %s983 = int_to_ptr.vmem [resolvable:$true] %s982
          %988 = dma.vmem_to_hbm [thread:$0]  %s983, 2048, %s981, %s967, 128, 256, 8
        $region123: #{mlp_forward.1} parent=102 // pred_fallthru
          _
      $region103: #{mlp_forward.1} parent=5 // pred_fallthru
        _
      %p989 = scmp.le.s32.totalorder 2, %s12
      // Predicated region
      $region124: #{mlp_forward.1} parent=5 // pred_check
        %p990 = pneg %p989
      $region125: #{mlp_forward.1} parent=5 // pred_check_branch
        %992 = sbr.rel (%p990) target = $region127
      $region126: #{mlp_forward.1} parent=5 // pred_region
        %s993 = ssub.s32 %s12, 2
        // Predicated region
        $region128: #{mlp_forward.1} parent=126 // pred_check
          %p994 = pneg %p144
        $region129: #{mlp_forward.1} parent=126 // pred_check_branch
          %996 = sbr.rel (%p994) target = $region131
        $region130: #{mlp_forward.1} parent=126 // pred_region
          %s997 = sand.u32 %s129, 1
          %s998 = scalar_lea.sflag [#allocation6], %s997
          %s999 = sand.u32 %s129, 1
          %s1000 = smul.addr %s999, 128
          %s1001 = scalar_lea.vmem [#allocation5], %s1000
          %1002 = dma.done %s998, 2048
        $region131: #{mlp_forward.1} parent=126 // pred_fallthru
          _
      $region127: #{mlp_forward.1} parent=5 // pred_fallthru
        _
    $region6: #{mlp_forward.1} parent=1 // loop_footer
      %s16 = sadd.s32 1, %s12
    $region7: #{mlp_forward.1} parent=1 // loop_footer_branch
      %11 = sbr.rel target = $region3
    $region8: #{mlp_forward.1} parent=1 // loop_exit
      _
    %1003 = vsyncpa [#allocation6], 1
    %s1004 = scalar_lea.sflag [#allocation6], 1
    %1005 = vsyncpa %s1004, 1

</llo_original>
